<compile_context>
chip_gen: v5e
topology: v5e:2x2
jax: 0.10.0
libtpu: 0.0.40
codegen_flags: <defaults>
</compile_context>

<pallas_src>
import jax
import jax.numpy as jnp
from jax.experimental import pallas as pl
from jax.experimental.pallas import tpu as pltpu  # noqa: F401  (TPU backend)

# ----------------------------- configuration ------------------------------
# Small, mutually-consistent shapes (the PyTorch defaults are inconsistent:
# the encoder expects input_dim+output_dim features AFTER concatenating the
# reduced image, so here input_dim = D_X + RED_D by construction).
B = 4                      # batch_size
N_MAX = 8                  # n_max (context points)
M_MAX = 8                  # m_max (target points)
D_X = 4                    # raw x feature dim of `tar`
OUT_DIM = 1                # output_dim
RED_D = 8                  # red_d (reduced image dim)
INPUT_DIM = D_X + RED_D    # module "input_dim" (12)
D_OBS = D_X + OUT_DIM      # obs last dim (x ++ y) = 5
IMG_D = 64                 # img_d
ENC_H = [32, 32, 32]       # encoder_hidden_dims
DEC_H = [32, 32]           # decoder_hidden_dims
NUM_DEC = 4                # num_decoders
H_ENC = ENC_H[-1]
DEC_IN = H_ENC + D_X + RED_D          # 44
FD0 = NUM_DEC * DEC_H[0]              # 128  (fused decoder hidden 0)
FD1 = NUM_DEC * DEC_H[1]              # 128  (fused decoder hidden 1)
FD2 = NUM_DEC * 2 * OUT_DIM           # 8    (fused decoder output)
PB_IN = H_ENC + IMG_D                 # 96   ([pooled | img] width)

# --------------------- weight slab layouts (row offsets) -------------------
# 32-lane slab: biases + encoder weights.
W32_B_IE, W32_BE1, W32_WE0O, W32_WIE, W32_WE1, W32_ROWS = 0, 1, 8, 16, 80, 112
# 128-lane slab: fused decoder weights/biases.
W128_WD0T, W128_BPB, W128_BD1, W128_WPB, W128_WD1, W128_ROWS = 0, 4, 5, 8, 104, 232
# 8-lane slab: fused decoder output head + gate (gate padded to 8 lanes).
WOUT_WD2, WOUT_BD2, WOUT_BG, WOUT_WG, WOUT_ROWS = 0, 128, 129, 136, 168


# ------------------------------- kernel -----------------------------------
def cnep_kernel(obs_en_ref, tar_em_ref, img_ref, mmat_ref,
                w32_ref, w128_ref, wout_ref,
                pred_ref, gate_ref):
    f32 = jnp.float32
    bf16 = jnp.bfloat16

    def mm(a, b):
        # bf16 MXU inputs (single pass on all generations), f32 accumulation.
        return jnp.dot(a.astype(bf16), b.astype(bf16),
                       preferred_element_type=f32)

    # ---- static slab views (each slab is one DMA; slices are in-VMEM) ----
    b_ie = w32_ref[W32_B_IE:W32_B_IE + 1, :]            # [1, H0]
    be1 = w32_ref[W32_BE1:W32_BE1 + 1, :]               # [1, H1]
    we0o = w32_ref[W32_WE0O:W32_WE0O + D_OBS, :]        # [D_OBS, H0]
    w_ie = w32_ref[W32_WIE:W32_WIE + IMG_D, :]          # [IMG_D, H0]
    we1 = w32_ref[W32_WE1:W32_WE1 + ENC_H[0], :]        # [H0, H1]

    wd0t = w128_ref[W128_WD0T:W128_WD0T + D_X, :]       # [D_X, FD0]
    b_perb = w128_ref[W128_BPB:W128_BPB + 1, :]         # [1, FD0]
    bd1 = w128_ref[W128_BD1:W128_BD1 + 1, :]            # [1, FD1]
    w_perb = w128_ref[W128_WPB:W128_WPB + PB_IN, :]     # [PB_IN, FD0]
    wd1 = w128_ref[W128_WD1:W128_WD1 + FD0, :]          # [FD0, FD1]

    wd2 = wout_ref[WOUT_WD2:WOUT_WD2 + FD1, :]          # [FD1, FD2]
    bd2 = wout_ref[WOUT_BD2:WOUT_BD2 + 1, :]            # [1, FD2]
    bg8 = wout_ref[WOUT_BG:WOUT_BG + 1, :]              # [1, 8] (lanes :4 real)
    wg8 = wout_ref[WOUT_WG:WOUT_WG + H_ENC, :]          # [H_ENC, 8]

    img = img_ref[...]                                  # [B, IMG_D]

    # ---- encoder (dim_reducer folded into w_ie / b_ie) ----
    img_e = mm(img, w_ie) + b_ie                        # [B, H0] per-batch term
    # [obs | one-hot(batch)] @ [We0_obs ; img_e] == layer0 + broadcast-add.
    h = jnp.maximum(
        mm(obs_en_ref[...], jnp.concatenate([we0o, img_e], axis=0)), 0.0)
    h = jnp.maximum(mm(h, we1) + be1, 0.0)               # [B*N, H1]

    # masked mean pooling (We2/be2 folded into downstream weights).
    pooled = mm(mmat_ref[...], h)                        # [B, H1]

    # ---- fused decoders ----
    # per-batch part: one matmul over the lane-concat [pooled | img].
    per_b = mm(jnp.concatenate([pooled, img], axis=-1), w_perb) + b_perb
    # targets: [tar | one-hot(batch)] @ [Wd0_tar ; per_b] in one matmul.
    d = jnp.maximum(
        mm(tar_em_ref[...], jnp.concatenate([wd0t, per_b], axis=0)), 0.0)
    d = jnp.maximum(mm(d, wd1) + bd1, 0.0)               # [B*M, FD1]
    pred_ref[...] = mm(d, wd2) + bd2                     # [B*M, FD2]

    # ---- gate: softmax(pooled @ (We2·Wg) + (be2·Wg + bg)) ----
    logits = (mm(pooled, wg8) + bg8)[:, :NUM_DEC]        # [B, NUM_DEC]
    logits = logits - jnp.max(logits, axis=-1, keepdims=True)
    e = jnp.exp(logits)
    gate_ref[...] = e * pl.reciprocal(jnp.sum(e, axis=-1, keepdims=True),
                                      approx=True)


# ------------------------------- wrapper -----------------------------------
def _block_diag(ws):
    """ws: [n, a, b] -> block-diagonal [n*a, n*b]."""
    n, a, b = ws.shape
    out = jnp.zeros((n * a, n * b), ws.dtype)
    for i in range(n):
        out = out.at[i * a:(i + 1) * a, i * b:(i + 1) * b].set(ws[i])
    return out


@jax.jit
def cnep_forward(params, obs, tar, obs_mask, img):
    p = params
    f32 = jnp.float32
    inv_d = 1.0 / IMG_D

    # ---- trace-time parameter composition (tiny, one-time under jit) ----
    wr_s = p["Wr"] * inv_d                              # fold 1/img_d
    br_s = p["br"].reshape(1, RED_D) * inv_d

    we0o = p["We0"][:D_OBS]                             # obs rows of We0
    we0i = p["We0"][D_OBS:]                             # img_red rows of We0
    be0 = p["be0"].reshape(1, ENC_H[0])
    be1 = p["be1"].reshape(1, ENC_H[1])
    be2 = p["be2"].reshape(1, ENC_H[2])

    # dim_reducer folded into the encoder image term.
    w_ie = wr_s @ we0i                                  # [IMG_D, H0]
    b_ie = br_s @ we0i + be0                            # [1, H0]

    # fuse the NUM_DEC decoders: lane-concat first layer, block-diag rest.
    wd0_f = jnp.transpose(p["Wd0"], (1, 0, 2)).reshape(DEC_IN, FD0)
    wd0r = wd0_f[:H_ENC]                                # r rows
    wd0t = wd0_f[H_ENC:H_ENC + D_X]                     # tar rows
    wd0i = wd0_f[H_ENC + D_X:]                          # img_red rows
    bd0 = p["bd0"].reshape(1, FD0)

    # fold We2/be2 (through the masked mean) and Wr into the per-batch weight.
    w_perb = jnp.concatenate([p["We2"] @ wd0r, wr_s @ wd0i], axis=0)  # [96,128]
    b_perb = be2 @ wd0r + br_s @ wd0i + bd0                           # [1,128]

    wd1 = _block_diag(p["Wd1"])                         # [FD0, FD1]
    bd1 = p["bd1"].reshape(1, FD1)
    wd2 = _block_diag(p["Wd2"])                         # [FD1, FD2]
    bd2 = p["bd2"].reshape(1, FD2)

    # gate with We2/be2 folded through the pooling.
    wg2 = p["We2"] @ p["Wg"]                            # [H_ENC, NUM_DEC]
    bg2 = be2 @ p["Wg"] + p["bg"].reshape(1, NUM_DEC)   # [1, NUM_DEC]

    # ---- pack weights/biases into 3 slabs (3 DMAs instead of ~22) ----
    w32 = jnp.zeros((W32_ROWS, ENC_H[0]), f32)
    w32 = w32.at[W32_B_IE:W32_B_IE + 1].set(b_ie)
    w32 = w32.at[W32_BE1:W32_BE1 + 1].set(be1)
    w32 = w32.at[W32_WE0O:W32_WE0O + D_OBS].set(we0o)
    w32 = w32.at[W32_WIE:W32_WIE + IMG_D].set(w_ie)
    w32 = w32.at[W32_WE1:W32_WE1 + ENC_H[0]].set(p["We1"])

    w128 = jnp.zeros((W128_ROWS, FD0), f32)
    w128 = w128.at[W128_WD0T:W128_WD0T + D_X].set(wd0t)
    w128 = w128.at[W128_BPB:W128_BPB + 1].set(b_perb)
    w128 = w128.at[W128_BD1:W128_BD1 + 1].set(bd1)
    w128 = w128.at[W128_WPB:W128_WPB + PB_IN].set(w_perb)
    w128 = w128.at[W128_WD1:W128_WD1 + FD0].set(wd1)

    wout = jnp.zeros((WOUT_ROWS, FD2), f32)
    wout = wout.at[WOUT_WD2:WOUT_WD2 + FD1].set(wd2)
    wout = wout.at[WOUT_BD2:WOUT_BD2 + 1].set(bd2)
    wout = wout.at[WOUT_BG:WOUT_BG + 1, :NUM_DEC].set(bg2)
    wout = wout.at[WOUT_WG:WOUT_WG + H_ENC, :NUM_DEC].set(wg2)

    # ---- runtime input preprocessing ----
    obs_flat = obs.reshape(B * N_MAX, D_OBS)
    tar_flat = tar.reshape(B * M_MAX, D_X)

    mask = obs_mask.astype(f32)                                    # [B, N]
    # caller guarantees >= 1 valid context point per batch element
    scaled = mask / mask.sum(axis=1, keepdims=True)                # mask/den
    mmat = (jnp.eye(B, dtype=f32)[:, :, None] *
            scaled[:, None, :]).reshape(B, B * N_MAX)              # [B, B*N]
    en = jnp.kron(jnp.eye(B, dtype=f32), jnp.ones((N_MAX, 1), f32))  # [B*N, B]
    em = jnp.kron(jnp.eye(B, dtype=f32), jnp.ones((M_MAX, 1), f32))  # [B*M, B]
    obs_en = jnp.concatenate([obs_flat, en], axis=-1)              # [B*N, 9]
    tar_em = jnp.concatenate([tar_flat, em], axis=-1)              # [B*M, 8]

    pred_flat, gate = pl.pallas_call(
        cnep_kernel,
        out_shape=(
            jax.ShapeDtypeStruct((B * M_MAX, FD2), f32),   # lane-packed pred
            jax.ShapeDtypeStruct((B, NUM_DEC), f32),       # gate
        ),
    )(obs_en, tar_em, img, mmat, w32, w128, wout)

    # un-fuse: [B*M, NUM_DEC*2] -> [NUM_DEC, B, M, 2*OUT_DIM]
    pred = pred_flat.reshape(B, M_MAX, NUM_DEC, 2 * OUT_DIM).transpose(2, 0, 1, 3)
    return pred, gate


# ----------------------------- pure-JAX reference ---------------------------
def cnep_reference(p, obs, tar, obs_mask, img):
    img_red = (img @ p["Wr"] + p["br"]) / img.shape[1]                 # [B, RED_D]
    img_rep_n = jnp.broadcast_to(img_red[:, None, :], (B, N_MAX, RED_D))
    obs_c = jnp.concatenate([obs, img_rep_n], axis=-1)
    h = jax.nn.relu(obs_c @ p["We0"] + p["be0"])
    h = jax.nn.relu(h @ p["We1"] + p["be1"])
    enc = h @ p["We2"] + p["be2"]                                      # [B, N, H]
    m = obs_mask.astype(jnp.float32)[..., None]
    r = (enc * m).sum(axis=1) / m.sum(axis=1)                          # [B, H]
    img_rep_m = jnp.broadcast_to(img_red[:, None, :], (B, M_MAX, RED_D))
    tar_c = jnp.concatenate([tar, img_rep_m], axis=-1)
    rep = jnp.concatenate(
        [jnp.broadcast_to(r[:, None, :], (B, M_MAX, H_ENC)), tar_c], axis=-1)
    preds = []
    for i in range(NUM_DEC):
        d = jax.nn.relu(rep @ p["Wd0"][i] + p["bd0"][i])
        d = jax.nn.relu(d @ p["Wd1"][i] + p["bd1"][i])
        preds.append(d @ p["Wd2"][i] + p["bd2"][i])
    pred = jnp.stack(preds, axis=0)
    gate = jax.nn.softmax(r @ p["Wg"] + p["bg"], axis=-1)
    return pred, gate


# ----------------------------- parameter init -------------------------------
def init_params(key):
    def linear(k, fan_in, fan_out):
        k1, k2 = jax.random.split(k)
        lim = 1.0 / (fan_in ** 0.5)
        w = jax.random.uniform(k1, (fan_in, fan_out), jnp.float32, -lim, lim)
        b = jax.random.uniform(k2, (fan_out,), jnp.float32, -lim, lim)
        return w, b

    keys = jax.random.split(key, 16)
    p = {}
    p["Wr"], p["br"] = linear(keys[0], IMG_D, RED_D)
    enc_in = INPUT_DIM + OUT_DIM          # = D_OBS + RED_D
    p["We0"], p["be0"] = linear(keys[1], enc_in, ENC_H[0])
    p["We1"], p["be1"] = linear(keys[2], ENC_H[0], ENC_H[1])
    p["We2"], p["be2"] = linear(keys[3], ENC_H[1], ENC_H[2])
    dec_in = H_ENC + INPUT_DIM            # = H_ENC + D_X + RED_D
    wd0, bd0, wd1, bd1, wd2, bd2 = [], [], [], [], [], []
    for i in range(NUM_DEC):
        k = jax.random.fold_in(keys[4], i)
        ka, kb, kc = jax.random.split(k, 3)
        w, b = linear(ka, dec_in, DEC_H[0]); wd0.append(w); bd0.append(b)
        w, b = linear(kb, DEC_H[0], DEC_H[1]); wd1.append(w); bd1.append(b)
        w, b = linear(kc, DEC_H[1], 2 * OUT_DIM); wd2.append(w); bd2.append(b)
    p["Wd0"], p["bd0"] = jnp.stack(wd0), jnp.stack(bd0)
    p["Wd1"], p["bd1"] = jnp.stack(wd1), jnp.stack(bd1)
    p["Wd2"], p["bd2"] = jnp.stack(wd2), jnp.stack(bd2)
    p["Wg"], p["bg"] = linear(keys[5], H_ENC, NUM_DEC)
    return p


# --------------------------------- main -------------------------------------
if __name__ == "__main__":
    key = jax.random.PRNGKey(0)
    kp, ko, kt, km, ki = jax.random.split(key, 5)

    params = init_params(kp)
    obs = jax.random.normal(ko, (B, N_MAX, D_OBS), jnp.float32)
    tar = jax.random.normal(kt, (B, M_MAX, D_X), jnp.float32)
    obs_mask = (jax.random.uniform(km, (B, N_MAX)) < 0.7)
    obs_mask = obs_mask.at[:, 0].set(True).astype(jnp.float32)  # >=1 valid ctx
    img = jax.random.normal(ki, (B, IMG_D), jnp.float32)

    pred, gate = cnep_forward(params, obs, tar, obs_mask, img)
    jax.block_until_ready((pred, gate))

    pred_ref, gate_ref = cnep_reference(params, obs, tar, obs_mask, img)
    assert pred.shape == (NUM_DEC, B, M_MAX, 2 * OUT_DIM)
    assert gate.shape == (B, NUM_DEC)
    # bf16 MXU inputs + approx reciprocal introduce ~1e-3 relative error.
    assert jnp.allclose(pred, pred_ref, atol=2e-2, rtol=2e-2)
    assert jnp.allclose(gate, gate_ref, atol=2e-2, rtol=2e-2)

    print("KERNEL_OK")
</pallas_src>

<mosaic_0001>
module attributes {stable_mosaic.version = 11 : i64} {
  func.func @cnep_kernel(%arg0: memref<32x9xf32, #tpu.memory_space<vmem>>, %arg1: memref<32x8xf32, #tpu.memory_space<vmem>>, %arg2: memref<4x64xf32, #tpu.memory_space<vmem>>, %arg3: memref<4x32xf32, #tpu.memory_space<vmem>>, %arg4: memref<112x32xf32, #tpu.memory_space<vmem>>, %arg5: memref<232x128xf32, #tpu.memory_space<vmem>>, %arg6: memref<168x8xf32, #tpu.memory_space<vmem>>, %arg7: memref<32x8xf32, #tpu.memory_space<vmem>>, %arg8: memref<4x4xf32, #tpu.memory_space<vmem>>) attributes {dimension_semantics = [], scalar_prefetch = 0 : i64, scratch_operands = 0 : i64, tpu.core_type = #tpu.core_type<tc>} {
    %c0 = arith.constant 0 : index
    %c0_0 = arith.constant 0 : index
    %0 = vector.load %arg4[%c0, %c0_0] : memref<112x32xf32, #tpu.memory_space<vmem>>, vector<1x32xf32>
    %c1 = arith.constant 1 : index
    %c0_1 = arith.constant 0 : index
    %1 = vector.load %arg4[%c1, %c0_1] : memref<112x32xf32, #tpu.memory_space<vmem>>, vector<1x32xf32>
    %c8 = arith.constant 8 : index
    %c0_2 = arith.constant 0 : index
    %2 = vector.load %arg4[%c8, %c0_2] : memref<112x32xf32, #tpu.memory_space<vmem>>, vector<5x32xf32>
    %c16 = arith.constant 16 : index
    %c0_3 = arith.constant 0 : index
    %3 = vector.load %arg4[%c16, %c0_3] : memref<112x32xf32, #tpu.memory_space<vmem>>, vector<64x32xf32>
    %c80 = arith.constant 80 : index
    %c0_4 = arith.constant 0 : index
    %4 = vector.load %arg4[%c80, %c0_4] : memref<112x32xf32, #tpu.memory_space<vmem>>, vector<32x32xf32>
    %c0_5 = arith.constant 0 : index
    %c0_6 = arith.constant 0 : index
    %5 = vector.load %arg5[%c0_5, %c0_6] : memref<232x128xf32, #tpu.memory_space<vmem>>, vector<4x128xf32>
    %c4 = arith.constant 4 : index
    %c0_7 = arith.constant 0 : index
    %6 = vector.load %arg5[%c4, %c0_7] : memref<232x128xf32, #tpu.memory_space<vmem>>, vector<1x128xf32>
    %c5 = arith.constant 5 : index
    %c0_8 = arith.constant 0 : index
    %7 = vector.load %arg5[%c5, %c0_8] : memref<232x128xf32, #tpu.memory_space<vmem>>, vector<1x128xf32>
    %c8_9 = arith.constant 8 : index
    %c0_10 = arith.constant 0 : index
    %8 = vector.load %arg5[%c8_9, %c0_10] : memref<232x128xf32, #tpu.memory_space<vmem>>, vector<96x128xf32>
    %c104 = arith.constant 104 : index
    %c0_11 = arith.constant 0 : index
    %9 = vector.load %arg5[%c104, %c0_11] : memref<232x128xf32, #tpu.memory_space<vmem>>, vector<128x128xf32>
    %c0_12 = arith.constant 0 : index
    %c0_13 = arith.constant 0 : index
    %10 = vector.load %arg6[%c0_12, %c0_13] : memref<168x8xf32, #tpu.memory_space<vmem>>, vector<128x8xf32>
    %c128 = arith.constant 128 : index
    %c0_14 = arith.constant 0 : index
    %11 = vector.load %arg6[%c128, %c0_14] : memref<168x8xf32, #tpu.memory_space<vmem>>, vector<1x8xf32>
    %c129 = arith.constant 129 : index
    %c0_15 = arith.constant 0 : index
    %12 = vector.load %arg6[%c129, %c0_15] : memref<168x8xf32, #tpu.memory_space<vmem>>, vector<1x8xf32>
    %c136 = arith.constant 136 : index
    %c0_16 = arith.constant 0 : index
    %13 = vector.load %arg6[%c136, %c0_16] : memref<168x8xf32, #tpu.memory_space<vmem>>, vector<32x8xf32>
    %c0_17 = arith.constant 0 : index
    %c0_18 = arith.constant 0 : index
    %14 = vector.load %arg2[%c0_17, %c0_18] : memref<4x64xf32, #tpu.memory_space<vmem>>, vector<4x64xf32>
    %15 = arith.truncf %14 : vector<4x64xf32> to vector<4x64xbf16>
    %16 = arith.truncf %3 : vector<64x32xf32> to vector<64x32xbf16>
    %cst = arith.constant dense<0.000000e+00> : vector<4x32xf32>
    %17 = tpu.matmul %15, %16, %cst {dimension_numbers = #tpu.dot_dimension_numbers<[1], [0], [0], [1], [0, 0, 1, 1], [], []>} : vector<4x64xbf16>, vector<64x32xbf16>, vector<4x32xf32> -> vector<4x32xf32>
    %18 = vector.broadcast %0 : vector<1x32xf32> to vector<4x32xf32>
    %19 = arith.addf %17, %18 : vector<4x32xf32>
    %c0_19 = arith.constant 0 : index
    %c0_20 = arith.constant 0 : index
    %20 = vector.load %arg0[%c0_19, %c0_20] : memref<32x9xf32, #tpu.memory_space<vmem>>, vector<32x9xf32>
    %21 = tpu.concatenate %2, %19 in 0 : vector<5x32xf32>, vector<4x32xf32> -> vector<9x32xf32>
    %22 = arith.truncf %20 : vector<32x9xf32> to vector<32x9xbf16>
    %23 = arith.truncf %21 : vector<9x32xf32> to vector<9x32xbf16>
    %cst_21 = arith.constant dense<0.000000e+00> : vector<32x32xf32>
    %24 = tpu.matmul %22, %23, %cst_21 {dimension_numbers = #tpu.dot_dimension_numbers<[1], [0], [0], [1], [0, 0, 1, 1], [], []>} : vector<32x9xbf16>, vector<9x32xbf16>, vector<32x32xf32> -> vector<32x32xf32>
    %cst_22 = arith.constant 0.000000e+00 : f32
    %25 = vector.broadcast %cst_22 : f32 to vector<32x32xf32>
    %26 = arith.maximumf %24, %25 : vector<32x32xf32>
    %27 = arith.truncf %26 : vector<32x32xf32> to vector<32x32xbf16>
    %28 = arith.truncf %4 : vector<32x32xf32> to vector<32x32xbf16>
    %cst_23 = arith.constant dense<0.000000e+00> : vector<32x32xf32>
    %29 = tpu.matmul %27, %28, %cst_23 {dimension_numbers = #tpu.dot_dimension_numbers<[1], [0], [0], [1], [0, 0, 1, 1], [], []>} : vector<32x32xbf16>, vector<32x32xbf16>, vector<32x32xf32> -> vector<32x32xf32>
    %30 = vector.broadcast %1 : vector<1x32xf32> to vector<32x32xf32>
    %31 = arith.addf %29, %30 : vector<32x32xf32>
    %cst_24 = arith.constant 0.000000e+00 : f32
    %32 = vector.broadcast %cst_24 : f32 to vector<32x32xf32>
    %33 = arith.maximumf %31, %32 : vector<32x32xf32>
    %c0_25 = arith.constant 0 : index
    %c0_26 = arith.constant 0 : index
    %34 = vector.load %arg3[%c0_25, %c0_26] : memref<4x32xf32, #tpu.memory_space<vmem>>, vector<4x32xf32>
    %35 = arith.truncf %34 : vector<4x32xf32> to vector<4x32xbf16>
    %36 = arith.truncf %33 : vector<32x32xf32> to vector<32x32xbf16>
    %cst_27 = arith.constant dense<0.000000e+00> : vector<4x32xf32>
    %37 = tpu.matmul %35, %36, %cst_27 {dimension_numbers = #tpu.dot_dimension_numbers<[1], [0], [0], [1], [0, 0, 1, 1], [], []>} : vector<4x32xbf16>, vector<32x32xbf16>, vector<4x32xf32> -> vector<4x32xf32>
    %38 = tpu.concatenate %37, %14 in 1 : vector<4x32xf32>, vector<4x64xf32> -> vector<4x96xf32>
    %39 = arith.truncf %38 : vector<4x96xf32> to vector<4x96xbf16>
    %40 = arith.truncf %8 : vector<96x128xf32> to vector<96x128xbf16>
    %cst_28 = arith.constant dense<0.000000e+00> : vector<4x128xf32>
    %41 = tpu.matmul %39, %40, %cst_28 {dimension_numbers = #tpu.dot_dimension_numbers<[1], [0], [0], [1], [0, 0, 1, 1], [], []>} : vector<4x96xbf16>, vector<96x128xbf16>, vector<4x128xf32> -> vector<4x128xf32>
    %42 = vector.broadcast %6 : vector<1x128xf32> to vector<4x128xf32>
    %43 = arith.addf %41, %42 : vector<4x128xf32>
    %c0_29 = arith.constant 0 : index
    %c0_30 = arith.constant 0 : index
    %44 = vector.load %arg1[%c0_29, %c0_30] : memref<32x8xf32, #tpu.memory_space<vmem>>, vector<32x8xf32>
    %45 = tpu.concatenate %5, %43 in 0 : vector<4x128xf32>, vector<4x128xf32> -> vector<8x128xf32>
    %46 = arith.truncf %44 : vector<32x8xf32> to vector<32x8xbf16>
    %47 = arith.truncf %45 : vector<8x128xf32> to vector<8x128xbf16>
    %cst_31 = arith.constant dense<0.000000e+00> : vector<32x128xf32>
    %48 = tpu.matmul %46, %47, %cst_31 {dimension_numbers = #tpu.dot_dimension_numbers<[1], [0], [0], [1], [0, 0, 1, 1], [], []>} : vector<32x8xbf16>, vector<8x128xbf16>, vector<32x128xf32> -> vector<32x128xf32>
    %cst_32 = arith.constant 0.000000e+00 : f32
    %49 = vector.broadcast %cst_32 : f32 to vector<32x128xf32>
    %50 = arith.maximumf %48, %49 : vector<32x128xf32>
    %51 = arith.truncf %50 : vector<32x128xf32> to vector<32x128xbf16>
    %52 = arith.truncf %9 : vector<128x128xf32> to vector<128x128xbf16>
    %cst_33 = arith.constant dense<0.000000e+00> : vector<32x128xf32>
    %53 = tpu.matmul %51, %52, %cst_33 {dimension_numbers = #tpu.dot_dimension_numbers<[1], [0], [0], [1], [0, 0, 1, 1], [], []>} : vector<32x128xbf16>, vector<128x128xbf16>, vector<32x128xf32> -> vector<32x128xf32>
    %54 = vector.broadcast %7 : vector<1x128xf32> to vector<32x128xf32>
    %55 = arith.addf %53, %54 : vector<32x128xf32>
    %cst_34 = arith.constant 0.000000e+00 : f32
    %56 = vector.broadcast %cst_34 : f32 to vector<32x128xf32>
    %57 = arith.maximumf %55, %56 : vector<32x128xf32>
    %58 = arith.truncf %57 : vector<32x128xf32> to vector<32x128xbf16>
    %59 = arith.truncf %10 : vector<128x8xf32> to vector<128x8xbf16>
    %cst_35 = arith.constant dense<0.000000e+00> : vector<32x8xf32>
    %60 = tpu.matmul %58, %59, %cst_35 {dimension_numbers = #tpu.dot_dimension_numbers<[1], [0], [0], [1], [0, 0, 1, 1], [], []>} : vector<32x128xbf16>, vector<128x8xbf16>, vector<32x8xf32> -> vector<32x8xf32>
    %61 = vector.broadcast %11 : vector<1x8xf32> to vector<32x8xf32>
    %62 = arith.addf %60, %61 : vector<32x8xf32>
    %c0_36 = arith.constant 0 : index
    %c0_37 = arith.constant 0 : index
    %63 = vector.load %arg7[%c0_36, %c0_37] : memref<32x8xf32, #tpu.memory_space<vmem>>, vector<32x8xf32>
    tpu.vector_store %arg7[%c0_36, %c0_37], %62 {strides = array<i32>} : memref<32x8xf32, #tpu.memory_space<vmem>>, vector<32x8xf32>,
    %64 = arith.truncf %37 : vector<4x32xf32> to vector<4x32xbf16>
    %65 = arith.truncf %13 : vector<32x8xf32> to vector<32x8xbf16>
    %cst_38 = arith.constant dense<0.000000e+00> : vector<4x8xf32>
    %66 = tpu.matmul %64, %65, %cst_38 {dimension_numbers = #tpu.dot_dimension_numbers<[1], [0], [0], [1], [0, 0, 1, 1], [], []>} : vector<4x32xbf16>, vector<32x8xbf16>, vector<4x8xf32> -> vector<4x8xf32>
    %67 = vector.broadcast %12 : vector<1x8xf32> to vector<4x8xf32>
    %68 = arith.addf %66, %67 : vector<4x8xf32>
    %69 = vector.extract_strided_slice %68 {offsets = [0, 0], sizes = [4, 4], strides = [1, 1]} : vector<4x8xf32> to vector<4x4xf32>
    %cst_39 = arith.constant dense<0xFF800000> : vector<4xf32>
    %70 = vector.multi_reduction <maximumf>, %69, %cst_39 [1] : vector<4x4xf32> to vector<4xf32>
    %71 = vector.shape_cast %70 : vector<4xf32> to vector<4x1xf32>
    %72 = vector.broadcast %71 : vector<4x1xf32> to vector<4x4xf32>
    %73 = arith.subf %69, %72 : vector<4x4xf32>
    %74 = math.exp %73 : vector<4x4xf32>
    %cst_40 = arith.constant dense<0.000000e+00> : vector<4xf32>
    %75 = vector.multi_reduction <add>, %74, %cst_40 [1] : vector<4x4xf32> to vector<4xf32>
    %76 = vector.shape_cast %75 : vector<4xf32> to vector<4x1xf32>
    %77 = tpu.reciprocal %76 {approx = true} : vector<4x1xf32> -> vector<4x1xf32>
    %78 = vector.broadcast %77 : vector<4x1xf32> to vector<4x4xf32>
    %79 = arith.mulf %74, %78 : vector<4x4xf32>
    %c0_41 = arith.constant 0 : index
    %c0_42 = arith.constant 0 : index
    %80 = vector.load %arg8[%c0_41, %c0_42] : memref<4x4xf32, #tpu.memory_space<vmem>>, vector<4x4xf32>
    tpu.vector_store %arg8[%c0_41, %c0_42], %79 {strides = array<i32>} : memref<4x4xf32, #tpu.memory_space<vmem>>, vector<4x4xf32>,
    return
  }
}

</mosaic_0001>

<llo_original>
// kernel: cnep_forward.1
$region0: #{cnep_forward.1}
  #allocation0 [shape = 'u32[]', space=smem, size = 0x4, offset = 0x4, fixed_abs, tag = 'smem constant byte address 0x4 - core index']
  #allocation1 [shape = 'u32[72,128]{1,0:T(1,128)}', space=vmem, size = 0x9000, scoped, tag = 'internal scratch']
  %s0 = inlined_call_operand.vmem [shape: f32[32,9], index: 0, kind: input, shape index: {}]
  %s1 = inlined_call_operand.vmem [shape: f32[32,8], index: 1, kind: input, shape index: {}]
  %s2 = inlined_call_operand.vmem [shape: f32[4,64], index: 2, kind: input, shape index: {}]
  %s3 = inlined_call_operand.vmem [shape: f32[4,32], index: 3, kind: input, shape index: {}]
  %s4 = inlined_call_operand.vmem [shape: f32[112,32], index: 4, kind: input, shape index: {}]
  %s5 = inlined_call_operand.vmem [shape: f32[232,128], index: 5, kind: input, shape index: {}]
  %s6 = inlined_call_operand.vmem [shape: f32[168,8], index: 6, kind: input, shape index: {}]
  %s7 = inlined_call_operand.vmem [shape: f32[32,8], index: 7, kind: output, shape index: {0}]
  %s8 = inlined_call_operand.hbm [shape: f32[4,4], index: 8, kind: output, shape index: {1}]
  %9 = xla_tuple %s7, %s8
  %s10 = sld [smem:[#allocation0]]
  $region46: #{cnep_forward.1} parent=0
    _
  %s12 = ssub.s32 1, %s10
  %s13 = scalar_select 0, %s12, %s10
  $region1: #{cnep_forward.1} parent=0
    #allocation2 [shape = 'u8[2048]{0}', space=vmem, size = 0x800, scoped, tag = 'output window, operand 1, single buffered']
    #allocation3 [shape = 's32[1]{0}', space=sflag, size = 0x4, scoped, tag = 'scoped memory for cnep_forward.1']
    %14 = vsyncpa [#allocation3], 0
    // Predicated region
    $region2: #{cnep_forward.1} parent=1 // pred_check
      _
    $region3: #{cnep_forward.1} parent=1 // pred_check_branch
      %16 = sbr.rel (0) target = $region5
    $region4: #{cnep_forward.1} parent=1 // pred_region
      _
    $region5: #{cnep_forward.1} parent=1 // pred_fallthru
      _
    // Predicated region
    $region6: #{cnep_forward.1} parent=1 // pred_check
      _
    $region7: #{cnep_forward.1} parent=1 // pred_check_branch
      %18 = sbr.rel (0) target = $region9
    $region8: #{cnep_forward.1} parent=1 // pred_region
      _
    $region9: #{cnep_forward.1} parent=1 // pred_fallthru
      _
    // Predicated region
    $region10: #{cnep_forward.1} parent=1 // pred_check
      _
    $region11: #{cnep_forward.1} parent=1 // pred_check_branch
      %20 = sbr.rel (0) target = $region13
    $region12: #{cnep_forward.1} parent=1 // pred_region
      _
    $region13: #{cnep_forward.1} parent=1 // pred_fallthru
      _
    // Predicated region
    $region14: #{cnep_forward.1} parent=1 // pred_check
      _
    $region15: #{cnep_forward.1} parent=1 // pred_check_branch
      %22 = sbr.rel (0) target = $region17
    $region16: #{cnep_forward.1} parent=1 // pred_region
      _
    $region17: #{cnep_forward.1} parent=1 // pred_fallthru
      _
    // Predicated region
    $region18: #{cnep_forward.1} parent=1 // pred_check
      _
    $region19: #{cnep_forward.1} parent=1 // pred_check_branch
      %24 = sbr.rel (0) target = $region21
    $region20: #{cnep_forward.1} parent=1 // pred_region
      _
    $region21: #{cnep_forward.1} parent=1 // pred_fallthru
      _
    // Predicated region
    $region22: #{cnep_forward.1} parent=1 // pred_check
      _
    $region23: #{cnep_forward.1} parent=1 // pred_check_branch
      %26 = sbr.rel (0) target = $region25
    $region24: #{cnep_forward.1} parent=1 // pred_region
      _
    $region25: #{cnep_forward.1} parent=1 // pred_fallthru
      _
    // Predicated region
    $region26: #{cnep_forward.1} parent=1 // pred_check
      _
    $region27: #{cnep_forward.1} parent=1 // pred_check_branch
      %28 = sbr.rel (0) target = $region29
    $region28: #{cnep_forward.1} parent=1 // pred_region
      _
    $region29: #{cnep_forward.1} parent=1 // pred_fallthru
      _
    %v30 = vld [vmem:[%s4] sm:$0x1]
    %v31 = vld [vmem:[%s4 + $0x1] sm:$0x1]
    %v32 = vld [vmem:[%s4 + $0x8] sm:$0x1f]
    %v33 = vld [vmem:[%s4 + $0x10] sm:$0xff]
    %v34 = vld [vmem:[%s4 + $0x18] sm:$0xff]
    %v35 = vld [vmem:[%s4 + $0x20] sm:$0xff]
    %v36 = vld [vmem:[%s4 + $0x28] sm:$0xff]
    %v37 = vld [vmem:[%s4 + $0x30] sm:$0xff]
    %v38 = vld [vmem:[%s4 + $0x38] sm:$0xff]
    %v39 = vld [vmem:[%s4 + $0x40] sm:$0xff]
    %v40 = vld [vmem:[%s4 + $0x48] sm:$0xff]
    %v41 = vld [vmem:[%s4 + $0x50] sm:$0xff]
    %v42 = vld [vmem:[%s4 + $0x58] sm:$0xff]
    %v43 = vld [vmem:[%s4 + $0x60] sm:$0xff]
    %v44 = vld [vmem:[%s4 + $0x68] sm:$0xff]
    %v45 = vld [vmem:[%s5] sm:$0xf]
    %v46 = vld [vmem:[%s5 + $0x4] sm:$0x1]
    %v47 = vld [vmem:[%s5 + $0x5] sm:$0x1]
    %v48 = vld [vmem:[%s5 + $0x8] sm:$0xff]
    %v49 = vld [vmem:[%s5 + $0x10] sm:$0xff]
    %v50 = vld [vmem:[%s5 + $0x18] sm:$0xff]
    %v51 = vld [vmem:[%s5 + $0x20] sm:$0xff]
    %v52 = vld [vmem:[%s5 + $0x28] sm:$0xff]
    %v53 = vld [vmem:[%s5 + $0x30] sm:$0xff]
    %v54 = vld [vmem:[%s5 + $0x38] sm:$0xff]
    %v55 = vld [vmem:[%s5 + $0x40] sm:$0xff]
    %v56 = vld [vmem:[%s5 + $0x48] sm:$0xff]
    %v57 = vld [vmem:[%s5 + $0x50] sm:$0xff]
    %v58 = vld [vmem:[%s5 + $0x58] sm:$0xff]
    %v59 = vld [vmem:[%s5 + $0x60] sm:$0xff]
    %v60 = vld [vmem:[%s5 + $0x68] sm:$0xff]
    %v61 = vld [vmem:[%s5 + $0x70] sm:$0xff]
    %v62 = vld [vmem:[%s5 + $0x78] sm:$0xff]
    %v63 = vld [vmem:[%s5 + $0x80] sm:$0xff]
    %v64 = vld [vmem:[%s5 + $0x88] sm:$0xff]
    %v65 = vld [vmem:[%s5 + $0x90] sm:$0xff]
    %v66 = vld [vmem:[%s5 + $0x98] sm:$0xff]
    %v67 = vld [vmem:[%s5 + $0xa0] sm:$0xff]
    %v68 = vld [vmem:[%s5 + $0xa8] sm:$0xff]
    %v69 = vld [vmem:[%s5 + $0xb0] sm:$0xff]
    %v70 = vld [vmem:[%s5 + $0xb8] sm:$0xff]
    %v71 = vld [vmem:[%s5 + $0xc0] sm:$0xff]
    %v72 = vld [vmem:[%s5 + $0xc8] sm:$0xff]
    %v73 = vld [vmem:[%s5 + $0xd0] sm:$0xff]
    %v74 = vld [vmem:[%s5 + $0xd8] sm:$0xff]
    %v75 = vld [vmem:[%s5 + $0xe0] sm:$0xff]
    %v76 = vld [vmem:[%s6] sm:$0xff]
    %v77 = vld [vmem:[%s6 + $0x8] sm:$0xff]
    %v78 = vld [vmem:[%s6 + $0x10] sm:$0xff]
    %v79 = vld [vmem:[%s6 + $0x18] sm:$0xff]
    %v80 = vld [vmem:[%s6 + $0x20] sm:$0xff]
    %v81 = vld [vmem:[%s6 + $0x28] sm:$0xff]
    %v82 = vld [vmem:[%s6 + $0x30] sm:$0xff]
    %v83 = vld [vmem:[%s6 + $0x38] sm:$0xff]
    %v84 = vld [vmem:[%s6 + $0x40] sm:$0xff]
    %v85 = vld [vmem:[%s6 + $0x48] sm:$0xff]
    %v86 = vld [vmem:[%s6 + $0x50] sm:$0xff]
    %v87 = vld [vmem:[%s6 + $0x58] sm:$0xff]
    %v88 = vld [vmem:[%s6 + $0x60] sm:$0xff]
    %v89 = vld [vmem:[%s6 + $0x68] sm:$0xff]
    %v90 = vld [vmem:[%s6 + $0x70] sm:$0xff]
    %v91 = vld [vmem:[%s6 + $0x78] sm:$0xff]
    %v92 = vld [vmem:[%s6 + $0x80] sm:$0x1]
    %v93 = vld [vmem:[%s6 + $0x81] sm:$0x1]
    %v94 = vld [vmem:[%s6 + $0x88] sm:$0xff]
    %v95 = vld [vmem:[%s6 + $0x90] sm:$0xff]
    %v96 = vld [vmem:[%s6 + $0x98] sm:$0xff]
    %v97 = vld [vmem:[%s6 + $0xa0] sm:$0xff]
    %v98 = vld [vmem:[%s2] sm:$0xf]
    %v99 = vpack.c.bf16 %v98, %v98
    %v100 = vpack.c.bf16 %v34, %v33
    %v101 = vpack.c.bf16 %v36, %v35
    %v102 = vpack.c.bf16 %v38, %v37
    %v103 = vpack.c.bf16 %v40, %v39
    %v104 = vperm.slane %v30, 0
    %vm105 = vcmask 523264
    %v107 = vsel %vm105, %v99, 0
    %109 = vmatpush.bf16.msra.mxu0 0
    %110 = vmatpush.bf16.msra.mxu0 0
    %111 = vmatpush.bf16.msra.mxu0 0
    %112 = vmatpush.bf16.msra.mxu0 0
    %113 = vmatpush.bf16.msra.mxu0 %v103
    %114 = vmatpush.bf16.msra.mxu0 %v102
    %115 = vmatpush.bf16.msra.mxu0 %v101
    %116 = vmatpush.bf16.msra.mxu0 %v100
    %117 = vmatmul.bf16.gmra.mxu0 %v107
    %v118 = vpop.f32.mrf.mxu0
    %v119 = vadd.f32 %v104, %v118
    %v120 = vpop.f32.mrf.mxu0
    %121 = vdwg.mxu0
    %v122 = vld [vmem:[%s0] sm:$0xff]
    %v123 = vld [vmem:[%s0 + $0x8] sm:$0xff]
    %v124 = vld [vmem:[%s0 + $0x10] sm:$0xff]
    %v125 = vld [vmem:[%s0 + $0x18] sm:$0xff]
    %v127 = vrot.slane %v119, 3
    %vm129 = vcmask 1044480
    %v130 = vsel %vm129, %v32, %v127
    %v131 = vpack.c.bf16 %v123, %v122
    %v132 = vpack.c.bf16 %v125, %v124
    %v133 = vpack.c.bf16 %v127, %v130
    %vm134 = vcmask 72704
    %v136 = vsel %vm134, %v131, 0
    %v139 = vsel %vm134, %v132, 0
    %vm141 = vcmask 1043456
    %v142 = vsel %vm141, 4294967295, 65535
    %v143 = vsel %vm129, %v142, 0
    %v145 = vand.u32 %v133, %v143
    %147 = vmatpush.bf16.msra.mxu0 0
    %148 = vmatpush.bf16.msra.mxu0 0
    %149 = vmatpush.bf16.msra.mxu0 0
    %150 = vmatpush.bf16.msra.mxu0 0
    %151 = vmatpush.bf16.msra.mxu0 0
    %152 = vmatpush.bf16.msra.mxu0 0
    %153 = vmatpush.bf16.msra.mxu0 0
    %154 = vmatpush.bf16.msra.mxu0 %v145
    %155 = vmatmul.bf16.gmra.mxu0 %v136
    %v156 = vpop.f32.mrf.mxu0
    %v157 = vadd.f32 0.0, %v156
    %v158 = vpop.f32.mrf.mxu0
    %v159 = vadd.f32 0.0, %v158
    %160 = vmatmul.bf16.gmra.mxu0 %v139
    %v161 = vpop.f32.mrf.mxu0
    %v162 = vadd.f32 0.0, %v161
    %v163 = vpop.f32.mrf.mxu0
    %v164 = vadd.f32 0.0, %v163
    %165 = vdwg.mxu0
    %v166 = vmax.f32 %v157, 0.0
    %v167 = vmax.f32 %v159, 0.0
    %v168 = vmax.f32 %v162, 0.0
    %v169 = vmax.f32 %v164, 0.0
    %v170 = vpack.c.bf16 %v167, %v166
    %v171 = vpack.c.bf16 %v169, %v168
    %v172 = vpack.c.bf16 %v42, %v41
    %v173 = vpack.c.bf16 %v44, %v43
    %v174 = vperm.slane %v31, 0
    %vm175 = vcmask 261120
    %v177 = vsel %vm175, %v170, 0
    %v180 = vsel %vm175, %v171, 0
    %182 = vmatpush.bf16.msra.mxu0 0
    %183 = vmatpush.bf16.msra.mxu0 0
    %184 = vmatpush.bf16.msra.mxu0 0
    %185 = vmatpush.bf16.msra.mxu0 0
    %186 = vmatpush.bf16.msra.mxu0 0
    %187 = vmatpush.bf16.msra.mxu0 0
    %188 = vmatpush.bf16.msra.mxu0 %v173
    %189 = vmatpush.bf16.msra.mxu0 %v172
    %190 = vmatmul.bf16.gmra.mxu0 %v177
    %v191 = vpop.f32.mrf.mxu0
    %v192 = vadd.f32 %v174, %v191
    %v193 = vpop.f32.mrf.mxu0
    %v194 = vadd.f32 %v174, %v193
    %195 = vmatmul.bf16.gmra.mxu0 %v180
    %v196 = vpop.f32.mrf.mxu0
    %v197 = vadd.f32 %v174, %v196
    %v198 = vpop.f32.mrf.mxu0
    %v199 = vadd.f32 %v174, %v198
    %200 = vdwg.mxu0
    %v201 = vmax.f32 %v192, 0.0
    %v202 = vmax.f32 %v194, 0.0
    %v203 = vmax.f32 %v197, 0.0
    %v204 = vmax.f32 %v199, 0.0
    %v205 = vld [vmem:[%s3] sm:$0xf]
    %v206 = vpack.c.bf16 %v205, %v205
    %v207 = vpack.c.bf16 %v202, %v201
    %v208 = vpack.c.bf16 %v204, %v203
    %v210 = vsel %vm175, %v206, 0
    %212 = vmatpush.bf16.msra.mxu0 0
    %213 = vmatpush.bf16.msra.mxu0 0
    %214 = vmatpush.bf16.msra.mxu0 0
    %215 = vmatpush.bf16.msra.mxu0 0
    %216 = vmatpush.bf16.msra.mxu0 0
    %217 = vmatpush.bf16.msra.mxu0 0
    %218 = vmatpush.bf16.msra.mxu0 %v208
    %219 = vmatpush.bf16.msra.mxu0 %v207
    %220 = vmatmul.bf16.gmra.mxu0 %v210
    %v221 = vpop.f32.mrf.mxu0
    %v222 = vadd.f32 0.0, %v221
    %v223 = vpop.f32.mrf.mxu0
    %224 = vdwg.mxu0
    %226 = vrot.lane.b32.xlu0 %v98, 32
    %v227 = vpop.permute.xlu0 %226
    %v229 = vsel %vm175, %v222, %v227
    %v230 = vpack.c.bf16 %v229, %v229
    %v231 = vpack.c.bf16 %v49, %v48
    %v232 = vpack.c.bf16 %v51, %v50
    %v233 = vpack.c.bf16 %v53, %v52
    %v234 = vpack.c.bf16 %v55, %v54
    %v235 = vpack.c.bf16 %v57, %v56
    %v236 = vpack.c.bf16 %v59, %v58
    %v237 = vperm.slane %v46, 0
    %vm238 = vcmask 785408
    %v240 = vsel %vm238, %v230, 0
    %242 = vmatpush.bf16.msra.mxu0 0
    %243 = vmatpush.bf16.msra.mxu0 0
    %244 = vmatpush.bf16.msra.mxu0 %v236
    %245 = vmatpush.bf16.msra.mxu0 %v235
    %246 = vmatpush.bf16.msra.mxu0 %v234
    %247 = vmatpush.bf16.msra.mxu0 %v233
    %248 = vmatpush.bf16.msra.mxu0 %v232
    %249 = vmatpush.bf16.msra.mxu0 %v231
    %250 = vmatmul.bf16.gmra.mxu0 %v240
    %v251 = vpop.f32.mrf.mxu0
    %v252 = vadd.f32 %v237, %v251
    %v253 = vpop.f32.mrf.mxu0
    %254 = vdwg.mxu0
    %v255 = vld [vmem:[%s1] sm:$0xff]
    %v256 = vld [vmem:[%s1 + $0x8] sm:$0xff]
    %v257 = vld [vmem:[%s1 + $0x10] sm:$0xff]
    %v258 = vld [vmem:[%s1 + $0x18] sm:$0xff]
    %v260 = vrot.slane %v252, 4
    %v262 = vsel %vm141, %v45, %v260
    %v263 = vpack.c.bf16 %v256, %v255
    %v264 = vpack.c.bf16 %v258, %v257
    %v265 = vpack.c.bf16 %v262, %v262
    %vm266 = vcmask 64512
    %v268 = vsel %vm266, %v263, 0
    %v271 = vsel %vm266, %v264, 0
    %v274 = vsel %vm141, %v265, 0
    %276 = vmatpush.bf16.msra.mxu0 0
    %277 = vmatpush.bf16.msra.mxu0 0
    %278 = vmatpush.bf16.msra.mxu0 0
    %279 = vmatpush.bf16.msra.mxu0 0
    %280 = vmatpush.bf16.msra.mxu0 0
    %281 = vmatpush.bf16.msra.mxu0 0
    %282 = vmatpush.bf16.msra.mxu0 0
    %283 = vmatpush.bf16.msra.mxu0 %v274
    %284 = vmatmul.bf16.gmra.mxu0 %v268
    %v285 = vpop.f32.mrf.mxu0
    %v286 = vadd.f32 0.0, %v285
    %v287 = vpop.f32.mrf.mxu0
    %v288 = vadd.f32 0.0, %v287
    %289 = vmatmul.bf16.gmra.mxu0 %v271
    %v290 = vpop.f32.mrf.mxu0
    %v291 = vadd.f32 0.0, %v290
    %v292 = vpop.f32.mrf.mxu0
    %v293 = vadd.f32 0.0, %v292
    %294 = vdwg.mxu0
    %v295 = vmax.f32 %v286, 0.0
    %v296 = vmax.f32 %v288, 0.0
    %v297 = vmax.f32 %v291, 0.0
    %v298 = vmax.f32 %v293, 0.0
    %v299 = vpack.c.bf16 %v296, %v295
    %v300 = vpack.c.bf16 %v298, %v297
    %v301 = vpack.c.bf16 %v61, %v60
    %v302 = vpack.c.bf16 %v63, %v62
    %v303 = vpack.c.bf16 %v65, %v64
    %v304 = vpack.c.bf16 %v67, %v66
    %v305 = vpack.c.bf16 %v69, %v68
    %v306 = vpack.c.bf16 %v71, %v70
    %v307 = vpack.c.bf16 %v73, %v72
    %v308 = vpack.c.bf16 %v75, %v74
    %v309 = vperm.slane %v47, 0
    %310 = vmatpush.bf16.msra.mxu0 %v308
    %311 = vmatpush.bf16.msra.mxu0 %v307
    %312 = vmatpush.bf16.msra.mxu0 %v306
    %313 = vmatpush.bf16.msra.mxu0 %v305
    %314 = vmatpush.bf16.msra.mxu0 %v304
    %315 = vmatpush.bf16.msra.mxu0 %v303
    %316 = vmatpush.bf16.msra.mxu0 %v302
    %317 = vmatpush.bf16.msra.mxu0 %v301
    %318 = vmatmul.bf16.gmra.mxu0 %v299
    %v319 = vpop.f32.mrf.mxu0
    %v320 = vadd.f32 %v309, %v319
    %v321 = vpop.f32.mrf.mxu0
    %v322 = vadd.f32 %v309, %v321
    %323 = vmatmul.bf16.gmra.mxu0 %v300
    %v324 = vpop.f32.mrf.mxu0
    %v325 = vadd.f32 %v309, %v324
    %v326 = vpop.f32.mrf.mxu0
    %v327 = vadd.f32 %v309, %v326
    %328 = vdwg.mxu0
    %v329 = vmax.f32 %v320, 0.0
    %v330 = vmax.f32 %v322, 0.0
    %v331 = vmax.f32 %v325, 0.0
    %v332 = vmax.f32 %v327, 0.0
    %v333 = vpack.c.bf16 %v330, %v329
    %v334 = vpack.c.bf16 %v332, %v331
    %v335 = vpack.c.bf16 %v77, %v76
    %v336 = vpack.c.bf16 %v79, %v78
    %v337 = vpack.c.bf16 %v81, %v80
    %v338 = vpack.c.bf16 %v83, %v82
    %v339 = vpack.c.bf16 %v85, %v84
    %v340 = vpack.c.bf16 %v87, %v86
    %v341 = vpack.c.bf16 %v89, %v88
    %v342 = vpack.c.bf16 %v91, %v90
    %v343 = vperm.slane %v92, 0
    %344 = vmatpush.bf16.msra.mxu0 %v342
    %345 = vmatpush.bf16.msra.mxu0 %v341
    %346 = vmatpush.bf16.msra.mxu0 %v340
    %347 = vmatpush.bf16.msra.mxu0 %v339
    %348 = vmatpush.bf16.msra.mxu0 %v338
    %349 = vmatpush.bf16.msra.mxu0 %v337
    %350 = vmatpush.bf16.msra.mxu0 %v336
    %351 = vmatpush.bf16.msra.mxu0 %v335
    %352 = vmatmul.bf16.gmra.mxu0 %v333
    %v353 = vpop.f32.mrf.mxu0
    %v354 = vadd.f32 %v343, %v353
    %v355 = vpop.f32.mrf.mxu0
    %v356 = vadd.f32 %v343, %v355
    %357 = vmatmul.bf16.gmra.mxu0 %v334
    %v358 = vpop.f32.mrf.mxu0
    %v359 = vadd.f32 %v343, %v358
    %v360 = vpop.f32.mrf.mxu0
    %v361 = vadd.f32 %v343, %v360
    %362 = vdwg.mxu0
    %363 = vst.msk [vmem:[%s7] sm:$0xff] %vm266, %v354
    %364 = vst.msk [vmem:[%s7 + $0x8] sm:$0xff] %vm266, %v356
    %365 = vst.msk [vmem:[%s7 + $0x10] sm:$0xff] %vm266, %v359
    %366 = vst.msk [vmem:[%s7 + $0x18] sm:$0xff] %vm266, %v361
    %v367 = vpack.c.bf16 %v222, %v222
    %v368 = vpack.c.bf16 %v95, %v94
    %v369 = vpack.c.bf16 %v97, %v96
    %v370 = vperm.slane %v93, 0
    %v372 = vsel %vm175, %v367, 0
    %374 = vmatpush.bf16.msra.mxu0 0
    %375 = vmatpush.bf16.msra.mxu0 0
    %376 = vmatpush.bf16.msra.mxu0 0
    %377 = vmatpush.bf16.msra.mxu0 0
    %378 = vmatpush.bf16.msra.mxu0 0
    %379 = vmatpush.bf16.msra.mxu0 0
    %380 = vmatpush.bf16.msra.mxu0 %v369
    %381 = vmatpush.bf16.msra.mxu0 %v368
    %382 = vmatmul.bf16.gmra.mxu0 %v372
    %v383 = vpop.f32.mrf.mxu0
    %v384 = vadd.f32 %v370, %v383
    %v385 = vpop.f32.mrf.mxu0
    %386 = vdwg.mxu0
    %vm387 = vcmask 27648
    %v388 = vsel %vm387, %v384, -inf
    %389 = vmax.xlane.f32.xlu0 %v388
    %v390 = vpop.xlane.xlu0 %389
    %v391 = vsub.f32 %v384, %v390
    %v392 = vmul.f32 %v391, 1.442695
    %v393 = vpow.pop %v392
    %v394 = vsel %vm387, %v393, 0.0
    %395 = vadd.xlane.f32.xlu0 %v394
    %v396 = vpop.xlane.xlu0 %395
    %v397 = vrcp.pop %v396
    %v398 = vmul.f32 %v393, %v397
    %399 = vst.msk [vmem:[#allocation2] sm:$0xf] %vm387, %v398
    // Predicated region
    $region30: #{cnep_forward.1} parent=1 // pred_check
      _
    $region31: #{cnep_forward.1} parent=1 // pred_check_branch
      %401 = sbr.rel (0) target = $region33
    $region32: #{cnep_forward.1} parent=1 // pred_region
      _
    $region33: #{cnep_forward.1} parent=1 // pred_fallthru
      _
    // Predicated region
    $region34: #{cnep_forward.1} parent=1 // pred_check
      _
    $region35: #{cnep_forward.1} parent=1 // pred_check_branch
      %403 = sbr.rel (0) target = $region37
    $region36: #{cnep_forward.1} parent=1 // pred_region
      %405 = vsyncadd [#allocation3], 0
      %s407 = sshll.u32 [#allocation2], 4
      %s408 = int_to_ptr.vmem [resolvable:$true] %s407
      %s409 = sshll.u32 %s8, 4
      %s410 = int_to_ptr.hbm [resolvable:$true] %s409
      %412 = dma.vmem_to_hbm [thread:$0]  %s408, 64, %s410, [#allocation3]
    $region37: #{cnep_forward.1} parent=1 // pred_fallthru
      _
    // Predicated region
    $region38: #{cnep_forward.1} parent=1 // pred_check
      _
    $region39: #{cnep_forward.1} parent=1 // pred_check_branch
      %414 = sbr.rel (0) target = $region41
    $region40: #{cnep_forward.1} parent=1 // pred_region
      _
    $region41: #{cnep_forward.1} parent=1 // pred_fallthru
      _
    // Predicated region
    $region42: #{cnep_forward.1} parent=1 // pred_check
      _
    $region43: #{cnep_forward.1} parent=1 // pred_check_branch
      %416 = sbr.rel (0) target = $region45
    $region44: #{cnep_forward.1} parent=1 // pred_region
      %418 = dma.done [#allocation3], 64
    $region45: #{cnep_forward.1} parent=1 // pred_fallthru
      _
    %419 = vsyncpa [#allocation3], 1

</llo_original>
